<compile_context>
chip_gen: v7x
topology: tpu7x:2x2x1
jax: 0.10.0
libtpu: 0.0.40
codegen_flags: <defaults>
</compile_context>

<pallas_src>
import functools

import jax
import jax.numpy as jnp
from jax.experimental import pallas as pl
from jax.experimental.pallas import tpu as pltpu

LN10 = 2.302585092994046

# TODO(synk): wire the real cat_mean / cat_std normalisation constants here.
# They are module-level globals in the original file and are not defined in
# the provided source; only index 2 is used by the forward pass.
CAT_MEAN = (0.10, 0.20, 0.30, 0.40)
CAT_STD = (1.10, 1.20, 0.50, 1.40)

_LANES = 128
_FEATURES = 4
_SAMPLES_PER_ROW = _LANES // _FEATURES  # 32 samples per packed row


def _loss_kernel(preds_ref, targets_ref, err_ref, z_ref, out_ref, acc_ref, *,
                 a2, b2, n_rows, rows_per_block, blocks_per_split):
    """Processes one packed (R, 128) tile; accumulates a per-split sum."""
    s = pl.program_id(0)  # split index        ("parallel" axis)
    i = pl.program_id(1)  # block within split ("arbitrary" axis)

    @pl.when(i == 0)
    def _init():
        acc_ref[...] = jnp.zeros_like(acc_ref)

    p = preds_ref[...]    # (R, 128)  feature = lane % 4
    t = targets_ref[...]  # (R, 128)
    e = err_ref[...]      # (R, 128)
    z = z_ref[...]        # (R, 32)   one z per sample

    lane = jax.lax.broadcasted_iota(jnp.int32, p.shape, 1)
    is_f2 = (lane & 3) == 2

    # 10 ** (x*std + mean) == exp(x*A + B).  exp() runs on every lane; the
    # non-feature-2 lanes are discarded by the select (select, not blend, so
    # an inf produced there is harmless).
    p_t = jnp.where(is_f2, jnp.exp(p * a2 + b2), p)
    t_t = jnp.where(is_f2, jnp.exp(t * a2 + b2), t)
    # `target_errs_transformed[:, 2] *= cat_std[2]` in the PyTorch code is
    # dead (immediately overwritten); the effective column-2 error is
    # |target_err[:, 2] * ln(10) * targets_transformed[:, 2]|.
    e_t = jnp.where(is_f2, jnp.abs(e * LN10 * t_t), e)

    # EUP approx reciprocal + one Newton step instead of a VALU f32 divide.
    r = pl.reciprocal(e_t, approx=True)
    r = r * (2.0 - e_t * r)

    d = p_t - t_t
    q = d * d * r  # per-element, un-weighted contribution

    # Per-sample sum over the 4 feature lanes via a one-hot matmul on the
    # otherwise idle MXU: (R,128) @ (128,32) -> (R,32); g[r,j] = sum_k q[r,4j+k].
    li = jax.lax.broadcasted_iota(jnp.int32, (_LANES, _SAMPLES_PER_ROW), 0)
    ci = jax.lax.broadcasted_iota(jnp.int32, (_LANES, _SAMPLES_PER_ROW), 1)
    gather4 = ((li >> 2) == ci).astype(jnp.float32)
    # bf16-exact head + residual keeps the group sums f32-accurate regardless
    # of how the f32 MXU path decomposes its operands.
    q_hi = q.astype(jnp.bfloat16).astype(jnp.float32)
    q_lo = q - q_hi
    g = (jnp.dot(q_hi, gather4, preferred_element_type=jnp.float32) +
         jnp.dot(q_lo, gather4, preferred_element_type=jnp.float32))

    # Row-level validity mask: kills rows past the end of the packed arrays
    # (ragged last block garbage) and fully-duplicated blocks created by the
    # clamped index map.  Padded-but-present rows contribute exactly 0 by
    # construction, so no element-level mask is needed.
    b_virt = s * blocks_per_block_split if False else s * blocks_per_split + i
    valid_rows = n_rows - b_virt * rows_per_block  # traced scalar, may be <= 0
    row32 = jax.lax.broadcasted_iota(jnp.int32, z.shape, 0)
    w = jnp.exp(-z)
    acc_ref[...] += jnp.where(row32 < valid_rows, w * g, 0.0)

    @pl.when(i == pl.num_programs(1) - 1)
    def _finalize():
        # Single cross-lane reduce per split; lane-dense (8,128) output block.
        out_ref[...] = jnp.full(out_ref.shape, jnp.sum(acc_ref[...]),
                                dtype=out_ref.dtype)


def _default_num_splits():
    """2 on multi-TensorCore chips (v7x), else 1 (v5e / v6e)."""
    try:
        info = pltpu.get_tpu_info()
        for name in ("num_tensorcores", "tensorcore_count", "num_cores",
                     "core_count"):
            v = getattr(info, name, None)
            if v:
                return max(1, min(int(v), 2))
    except Exception:
        pass
    try:
        dev = jax.devices()[0]
        for name in ("num_cores", "core_count"):
            v = getattr(dev, name, None)
            if v:
                return max(1, min(int(v), 2))
    except Exception:
        pass
    return 1


def weighted_custom_exp_z_loss(preds, targets, target_err, target_z,
                               exponent: float = 1.0, *,
                               block_samples: int = 131072,
                               num_splits=None):
    """Pallas equivalent of WeightedCustomExpZLoss(exponent).forward(...)."""
    del exponent  # unused in the reference forward pass
    n, c = preds.shape
    if c != _FEATURES:
        raise ValueError(f"expected {_FEATURES} feature columns, got {c}")

    preds = jnp.asarray(preds, jnp.float32)
    targets = jnp.asarray(targets, jnp.float32)
    target_err = jnp.asarray(target_err, jnp.float32)
    z = jnp.asarray(target_z, jnp.float32).reshape(-1)
    if z.shape[0] != n:
        raise ValueError("target_z must have one entry per sample")

    # Pad only up to the 32-sample packed-row granularity (and to >= 256
    # samples so a row block always spans >= 8 sublanes).  For batch sizes
    # that are multiples of 32 this is a no-op -- no full-array copies happen
    # before the kernel.  err is padded with 1.0 so padded samples contribute
    # exactly 0 (preds == targets == 0) without element-level masking.
    n_pad = max(-(-n // _SAMPLES_PER_ROW) * _SAMPLES_PER_ROW,
                8 * _SAMPLES_PER_ROW)
    pad = n_pad - n
    if pad:
        preds = jnp.pad(preds, ((0, pad), (0, 0)))
        targets = jnp.pad(targets, ((0, pad), (0, 0)))
        target_err = jnp.pad(target_err, ((0, pad), (0, 0)),
                             constant_values=1.0)
        z = jnp.pad(z, (0, pad))

    n_rows = n_pad // _SAMPLES_PER_ROW
    # Free, contiguous reshapes into the lane-dense packed layout.
    preds_r = preds.reshape(n_rows, _LANES)
    targets_r = targets.reshape(n_rows, _LANES)
    err_r = target_err.reshape(n_rows, _LANES)
    z_r = z.reshape(n_rows, _SAMPLES_PER_ROW)

    if num_splits is None:
        num_splits = _default_num_splits()

    # Row-block sizing: big blocks amortise per-step overhead; ~14 MiB VMEM
    # at the default size with double buffering (fits the 32 MiB scoped
    # request on every generation).
    rows_per_block = max(min(block_samples // _SAMPLES_PER_ROW, n_rows), 1)
    if rows_per_block < n_rows:
        rows_per_block = max((rows_per_block // 8) * 8, 8)
    total_blocks = -(-n_rows // rows_per_block)
    ns = max(1, min(int(num_splits), total_blocks))
    bps = -(-total_blocks // ns)

    kernel = functools.partial(
        _loss_kernel,
        a2=float(LN10 * CAT_STD[2]),
        b2=float(LN10 * CAT_MEAN[2]),
        n_rows=int(n_rows),
        rows_per_block=int(rows_per_block),
        blocks_per_split=int(bps),
    )

    last_block = total_blocks - 1

    def in_map(s, i):
        # Clamp so virtual (duplicated) blocks read valid memory; their
        # contribution is masked to zero inside the kernel.
        return (jnp.minimum(s * bps + i, last_block), 0)

    grid_spec = pltpu.PrefetchScalarGridSpec(
        num_scalar_prefetch=0,
        grid=(ns, bps),
        in_specs=[
            pl.BlockSpec((rows_per_block, _LANES), in_map),            # preds
            pl.BlockSpec((rows_per_block, _LANES), in_map),            # targets
            pl.BlockSpec((rows_per_block, _LANES), in_map),            # err
            pl.BlockSpec((rows_per_block, _SAMPLES_PER_ROW), in_map),  # z
        ],
        out_specs=pl.BlockSpec((8, 128), lambda s, i: (s, 0)),
        scratch_shapes=[
            pltpu.VMEM((rows_per_block, _SAMPLES_PER_ROW), jnp.float32)],
    )

    out = pl.pallas_call(
        kernel,
        out_shape=jax.ShapeDtypeStruct((ns * 8, 128), jnp.float32),
        grid_spec=grid_spec,
        compiler_params=pltpu.CompilerParams(
            # Outer (split) axis shards across TensorCores on v7x; the inner
            # axis carries the resident accumulator so it must stay arbitrary.
            dimension_semantics=("parallel", "arbitrary"),
            vmem_limit_bytes=32 * 1024 * 1024,
        ),
    )(preds_r, targets_r, err_r, z_r)

    partials = out[0::8, 0]  # one partial sum per split
    return jnp.sum(partials) / jnp.float32(n * _FEATURES)


def _reference_loss(preds, targets, target_err, target_z):
    """Pure-JAX reference mirroring the PyTorch forward, for verification."""
    cm2 = jnp.float32(CAT_MEAN[2])
    cs2 = jnp.float32(CAT_STD[2])
    preds_t = preds.at[:, 2].set(10.0 ** (preds[:, 2] * cs2 + cm2))
    targets_t = targets.at[:, 2].set(10.0 ** (targets[:, 2] * cs2 + cm2))
    err_t = target_err.at[:, 2].set(
        jnp.abs(target_err[:, 2] * LN10 * targets_t[:, 2]))
    z_weight = jnp.exp(-target_z)
    return jnp.mean(z_weight * (preds_t - targets_t) ** 2 / err_t)


if __name__ == "__main__":
    def make_inputs(n, c, key):
        k1, k2, k3, k4 = jax.random.split(key, 4)
        preds = jax.random.normal(k1, (n, c), dtype=jnp.float32)
        targets = jax.random.normal(k2, (n, c), dtype=jnp.float32)
        # keep errors strictly positive so the division is well-behaved
        target_err = jnp.abs(jax.random.normal(k3, (n, c),
                                               dtype=jnp.float32)) + 0.1
        target_z = jax.random.uniform(k4, (n, 1), dtype=jnp.float32,
                                      minval=0.0, maxval=2.0)
        return preds, targets, target_err, target_z

    # Small canonical shape (batch=16, features=4): single block, tiny pad.
    p1, t1, e1, z1 = make_inputs(16, 4, jax.random.PRNGKey(0))
    loss1 = jax.block_until_ready(
        weighted_custom_exp_z_loss(p1, t1, e1, z1, exponent=2.0))
    ref1 = _reference_loss(p1, t1, e1, z1)
    assert jnp.allclose(loss1, ref1, rtol=5e-5, atol=1e-6), (loss1, ref1)

    # Ragged batch + multi-block accumulation + clamped duplicate block:
    # n=1100 -> 35 packed rows, 8-row blocks -> 5 real blocks on a (2, 3) grid.
    p2, t2, e2, z2 = make_inputs(1100, 4, jax.random.PRNGKey(1))
    loss2 = jax.block_until_ready(
        weighted_custom_exp_z_loss(p2, t2, e2, z2, exponent=2.0,
                                   block_samples=256, num_splits=2))
    ref2 = _reference_loss(p2, t2, e2, z2)
    assert jnp.allclose(loss2, ref2, rtol=5e-5, atol=1e-6), (loss2, ref2)

    print("KERNEL_OK")
</pallas_src>

<mosaic_0001>
module attributes {stable_mosaic.version = 11 : i64} {
  func.func @_loss_kernel(%arg0: i32, %arg1: i32, %arg2: memref<8x128xf32, #tpu.memory_space<vmem>>, %arg3: memref<8x128xf32, #tpu.memory_space<vmem>>, %arg4: memref<8x128xf32, #tpu.memory_space<vmem>>, %arg5: memref<8x32xf32, #tpu.memory_space<vmem>>, %arg6: memref<8x128xf32, #tpu.memory_space<vmem>>, %arg7: memref<8x32xf32, #tpu.memory_space<vmem>>) attributes {dimension_semantics = [#tpu.dimension_semantics<parallel>, #tpu.dimension_semantics<arbitrary>], iteration_bounds = array<i64: 1, 1>, scalar_prefetch = 0 : i64, scratch_operands = 1 : i64, tpu.core_type = #tpu.core_type<tc>, window_params = [{transform_indices = @transform_0, window_bounds = array<i64: 8, 128>}, {transform_indices = @transform_1, window_bounds = array<i64: 8, 128>}, {transform_indices = @transform_2, window_bounds = array<i64: 8, 128>}, {transform_indices = @transform_3, window_bounds = array<i64: 8, 32>}, {transform_indices = @transform_4, window_bounds = array<i64: 8, 128>}]} {
    %c0_i32 = arith.constant 0 : i32
    %0 = arith.cmpi eq, %arg1, %c0_i32 : i32
    %1 = arith.extui %0 : i1 to i32
    %c0_i32_0 = arith.constant 0 : i32
    %2 = arith.cmpi ne, %1, %c0_i32_0 : i32
    scf.if %2 {
      %cst_25 = arith.constant 0.000000e+00 : f32
      %69 = vector.broadcast %cst_25 : f32 to vector<8x32xf32>
      %c0_26 = arith.constant 0 : index
      %c0_27 = arith.constant 0 : index
      %70 = vector.load %arg7[%c0_26, %c0_27] : memref<8x32xf32, #tpu.memory_space<vmem>>, vector<8x32xf32>
      tpu.vector_store %arg7[%c0_26, %c0_27], %69 {strides = array<i32>} : memref<8x32xf32, #tpu.memory_space<vmem>>, vector<8x32xf32>,
    } else {
    }
    %c0 = arith.constant 0 : index
    %c0_1 = arith.constant 0 : index
    %3 = vector.load %arg2[%c0, %c0_1] : memref<8x128xf32, #tpu.memory_space<vmem>>, vector<8x128xf32>
    %c0_2 = arith.constant 0 : index
    %c0_3 = arith.constant 0 : index
    %4 = vector.load %arg3[%c0_2, %c0_3] : memref<8x128xf32, #tpu.memory_space<vmem>>, vector<8x128xf32>
    %c0_4 = arith.constant 0 : index
    %c0_5 = arith.constant 0 : index
    %5 = vector.load %arg4[%c0_4, %c0_5] : memref<8x128xf32, #tpu.memory_space<vmem>>, vector<8x128xf32>
    %c0_6 = arith.constant 0 : index
    %c0_7 = arith.constant 0 : index
    %6 = vector.load %arg5[%c0_6, %c0_7] : memref<8x32xf32, #tpu.memory_space<vmem>>, vector<8x32xf32>
    %7 = tpu.iota {dimensions = array<i32: 1>} : vector<8x128xi32>
    %c3_i32 = arith.constant 3 : i32
    %8 = vector.broadcast %c3_i32 : i32 to vector<8x128xi32>
    %9 = arith.andi %7, %8 : vector<8x128xi32>
    %c2_i32 = arith.constant 2 : i32
    %10 = vector.broadcast %c2_i32 : i32 to vector<8x128xi32>
    %11 = arith.cmpi eq, %9, %10 : vector<8x128xi32>
    %cst = arith.constant 1.15129256 : f32
    %12 = vector.broadcast %cst : f32 to vector<8x128xf32>
    %13 = arith.mulf %3, %12 : vector<8x128xf32>
    %cst_8 = arith.constant 0.690775514 : f32
    %14 = vector.broadcast %cst_8 : f32 to vector<8x128xf32>
    %15 = arith.addf %13, %14 : vector<8x128xf32>
    %16 = math.exp %15 : vector<8x128xf32>
    %17 = arith.select %11, %16, %3 : vector<8x128xi1>, vector<8x128xf32>
    %cst_9 = arith.constant 1.15129256 : f32
    %18 = vector.broadcast %cst_9 : f32 to vector<8x128xf32>
    %19 = arith.mulf %4, %18 : vector<8x128xf32>
    %cst_10 = arith.constant 0.690775514 : f32
    %20 = vector.broadcast %cst_10 : f32 to vector<8x128xf32>
    %21 = arith.addf %19, %20 : vector<8x128xf32>
    %22 = math.exp %21 : vector<8x128xf32>
    %23 = arith.select %11, %22, %4 : vector<8x128xi1>, vector<8x128xf32>
    %cst_11 = arith.constant 2.30258512 : f32
    %24 = vector.broadcast %cst_11 : f32 to vector<8x128xf32>
    %25 = arith.mulf %5, %24 : vector<8x128xf32>
    %26 = arith.mulf %25, %23 : vector<8x128xf32>
    %27 = math.absf %26 : vector<8x128xf32>
    %28 = arith.select %11, %27, %5 : vector<8x128xi1>, vector<8x128xf32>
    %29 = tpu.reciprocal %28 {approx = true} : vector<8x128xf32> -> vector<8x128xf32>
    %30 = arith.mulf %28, %29 : vector<8x128xf32>
    %cst_12 = arith.constant 2.000000e+00 : f32
    %31 = vector.broadcast %cst_12 : f32 to vector<8x128xf32>
    %32 = arith.subf %31, %30 : vector<8x128xf32>
    %33 = arith.mulf %29, %32 : vector<8x128xf32>
    %34 = arith.subf %17, %23 : vector<8x128xf32>
    %35 = arith.mulf %34, %34 : vector<8x128xf32>
    %36 = arith.mulf %35, %33 : vector<8x128xf32>
    %37 = tpu.iota {dimensions = array<i32: 0>} : vector<128x32xi32>
    %38 = tpu.iota {dimensions = array<i32: 1>} : vector<128x32xi32>
    %c2_i32_13 = arith.constant 2 : i32
    %39 = vector.broadcast %c2_i32_13 : i32 to vector<128x32xi32>
    %40 = arith.shrsi %37, %39 : vector<128x32xi32>
    %41 = arith.cmpi eq, %40, %38 : vector<128x32xi32>
    %42 = arith.extui %41 : vector<128x32xi1> to vector<128x32xi32>
    %43 = arith.sitofp %42 : vector<128x32xi32> to vector<128x32xf32>
    %44 = arith.truncf %36 : vector<8x128xf32> to vector<8x128xbf16>
    %45 = arith.extf %44 : vector<8x128xbf16> to vector<8x128xf32>
    %46 = arith.subf %36, %45 : vector<8x128xf32>
    %cst_14 = arith.constant dense<0.000000e+00> : vector<8x32xf32>
    %47 = tpu.matmul %45, %43, %cst_14 {dimension_numbers = #tpu.dot_dimension_numbers<[1], [0], [0], [1], [0, 0, 1, 1], [], []>} : vector<8x128xf32>, vector<128x32xf32>, vector<8x32xf32> -> vector<8x32xf32>
    %cst_15 = arith.constant dense<0.000000e+00> : vector<8x32xf32>
    %48 = tpu.matmul %46, %43, %cst_15 {dimension_numbers = #tpu.dot_dimension_numbers<[1], [0], [0], [1], [0, 0, 1, 1], [], []>} : vector<8x128xf32>, vector<128x32xf32>, vector<8x32xf32> -> vector<8x32xf32>
    %49 = arith.addf %47, %48 : vector<8x32xf32>
    %c1_i32 = arith.constant 1 : i32
    %50 = arith.muli %arg0, %c1_i32 : i32
    %51 = arith.addi %50, %arg1 : i32
    %c8_i32 = arith.constant 8 : i32
    %52 = arith.muli %51, %c8_i32 : i32
    %c8_i32_16 = arith.constant 8 : i32
    %53 = arith.subi %c8_i32_16, %52 : i32
    %54 = tpu.iota {dimensions = array<i32: 0>} : vector<8x32xi32>
    %cst_17 = arith.constant 0.000000e+00 : f32
    %55 = vector.broadcast %cst_17 : f32 to vector<8x32xf32>
    %56 = arith.subf %55, %6 : vector<8x32xf32>
    %57 = math.exp %56 : vector<8x32xf32>
    %c0_18 = arith.constant 0 : index
    %c0_19 = arith.constant 0 : index
    %58 = vector.load %arg7[%c0_18, %c0_19] : memref<8x32xf32, #tpu.memory_space<vmem>>, vector<8x32xf32>
    %59 = vector.broadcast %53 : i32 to vector<8x32xi32>
    %60 = arith.cmpi slt, %54, %59 : vector<8x32xi32>
    %61 = arith.mulf %57, %49 : vector<8x32xf32>
    %cst_20 = arith.constant 0.000000e+00 : f32
    %62 = vector.broadcast %cst_20 : f32 to vector<8x32xf32>
    %63 = arith.select %60, %61, %62 : vector<8x32xi1>, vector<8x32xf32>
    %64 = arith.addf %58, %63 : vector<8x32xf32>
    %c0_21 = arith.constant 0 : index
    %c0_22 = arith.constant 0 : index
    %65 = vector.load %arg7[%c0_21, %c0_22] : memref<8x32xf32, #tpu.memory_space<vmem>>, vector<8x32xf32>
    tpu.vector_store %arg7[%c0_21, %c0_22], %64 {strides = array<i32>} : memref<8x32xf32, #tpu.memory_space<vmem>>, vector<8x32xf32>,
    %c0_i32_23 = arith.constant 0 : i32
    %66 = arith.cmpi eq, %arg1, %c0_i32_23 : i32
    %67 = arith.extui %66 : i1 to i32
    %c0_i32_24 = arith.constant 0 : i32
    %68 = arith.cmpi ne, %67, %c0_i32_24 : i32
    scf.if %68 {
      %c0_25 = arith.constant 0 : index
      %c0_26 = arith.constant 0 : index
      %69 = vector.load %arg7[%c0_25, %c0_26] : memref<8x32xf32, #tpu.memory_space<vmem>>, vector<8x32xf32>
      %70 = vector.shape_cast %69 : vector<8x32xf32> to vector<1x8x32xf32>
      %cst_27 = arith.constant dense<0.000000e+00> : vector<1xf32>
      %71 = vector.multi_reduction <add>, %70, %cst_27 [1, 2] : vector<1x8x32xf32> to vector<1xf32>
      %72 = vector.shape_cast %71 : vector<1xf32> to vector<1x1x1xf32>
      %73 = vector.extract %72[0, 0, 0] : f32 from vector<1x1x1xf32>
      %74 = vector.broadcast %73 : f32 to vector<8x128xf32>
      %c0_28 = arith.constant 0 : index
      %c0_29 = arith.constant 0 : index
      %75 = vector.load %arg6[%c0_28, %c0_29] : memref<8x128xf32, #tpu.memory_space<vmem>>, vector<8x128xf32>
      tpu.vector_store %arg6[%c0_28, %c0_29], %74 {strides = array<i32>} : memref<8x128xf32, #tpu.memory_space<vmem>>, vector<8x128xf32>,
    } else {
    }
    return
  }
  func.func @transform_0(%arg0: i32, %arg1: i32) -> (i32, i32) {
    %c1_i32 = arith.constant 1 : i32
    %0 = arith.muli %arg0, %c1_i32 : i32
    %1 = arith.addi %0, %arg1 : i32
    %c0_i32 = arith.constant 0 : i32
    %2 = arith.minsi %1, %c0_i32 : i32
    %c0_i32_0 = arith.constant 0 : i32
    %c0_i32_1 = arith.constant 0 : i32
    return %2, %c0_i32_0 : i32, i32
  }
  func.func @transform_1(%arg0: i32, %arg1: i32) -> (i32, i32) {
    %c1_i32 = arith.constant 1 : i32
    %0 = arith.muli %arg0, %c1_i32 : i32
    %1 = arith.addi %0, %arg1 : i32
    %c0_i32 = arith.constant 0 : i32
    %2 = arith.minsi %1, %c0_i32 : i32
    %c0_i32_0 = arith.constant 0 : i32
    %c0_i32_1 = arith.constant 0 : i32
    return %2, %c0_i32_0 : i32, i32
  }
  func.func @transform_2(%arg0: i32, %arg1: i32) -> (i32, i32) {
    %c1_i32 = arith.constant 1 : i32
    %0 = arith.muli %arg0, %c1_i32 : i32
    %1 = arith.addi %0, %arg1 : i32
    %c0_i32 = arith.constant 0 : i32
    %2 = arith.minsi %1, %c0_i32 : i32
    %c0_i32_0 = arith.constant 0 : i32
    %c0_i32_1 = arith.constant 0 : i32
    return %2, %c0_i32_0 : i32, i32
  }
  func.func @transform_3(%arg0: i32, %arg1: i32) -> (i32, i32) {
    %c1_i32 = arith.constant 1 : i32
    %0 = arith.muli %arg0, %c1_i32 : i32
    %1 = arith.addi %0, %arg1 : i32
    %c0_i32 = arith.constant 0 : i32
    %2 = arith.minsi %1, %c0_i32 : i32
    %c0_i32_0 = arith.constant 0 : i32
    %c0_i32_1 = arith.constant 0 : i32
    return %2, %c0_i32_0 : i32, i32
  }
  func.func @transform_4(%arg0: i32, %arg1: i32) -> (i32, i32) {
    %c0_i32 = arith.constant 0 : i32
    %c0_i32_0 = arith.constant 0 : i32
    return %arg0, %c0_i32 : i32, i32
  }
}

</mosaic_0001>

<llo_original>
// kernel: tpu_custom_call.1
$region0: #{tpu_custom_call.1}
  #allocation0 [shape = 'u32[]', space=smem, size = 0x4, offset = 0x4, fixed_abs, tag = 'smem constant byte address 0x4 - core index']
  #allocation1 [shape = 'u32[144,128]{1,0:T(1,128)}', space=vmem, size = 0x12000, scoped, tag = 'internal scratch']
  #allocation2 [shape = 'f32[8,32]{1,0:T(8,128)}', space=vmem, size = 0x1000, scoped, tag = 'scratch operand']
  %s0 = inlined_call_operand.hbm [shape: f32[8,128], index: 0, kind: input, shape index: {}]
  %s1 = inlined_call_operand.hbm [shape: f32[8,128], index: 1, kind: input, shape index: {}]
  %s2 = inlined_call_operand.hbm [shape: f32[8,128], index: 2, kind: input, shape index: {}]
  %s3 = inlined_call_operand.vmem [shape: f32[8,32], index: 3, kind: input, shape index: {}]
  %s4 = inlined_call_operand.hbm [shape: f32[8,128], index: 4, kind: output, shape index: {}]
  %s5 = sld [smem:[#allocation0]]
  $region46: #{tpu_custom_call.1} parent=0
    _
  %s7 = ssub.s32 1, %s5
  %s8 = scalar_select 0, %s7, %s5
  $region1: #{tpu_custom_call.1} parent=0
    #allocation3 [shape = 'u8[4096]{0}', space=vmem, size = 0x1000, scoped, tag = 'input window, operand 0, single buffered']
    #allocation4 [shape = 's32[1]{0}', space=sflag, size = 0x4, scoped, tag = 'scoped memory for tpu_custom_call.1']
    #allocation5 [shape = 's32[1]{0}', space=sflag, size = 0x4, scoped, tag = 'scoped memory for tpu_custom_call.1']
    #allocation6 [shape = 'u8[4096]{0}', space=vmem, size = 0x1000, scoped, tag = 'input window, operand 1, single buffered']
    #allocation7 [shape = 's32[1]{0}', space=sflag, size = 0x4, scoped, tag = 'scoped memory for tpu_custom_call.1']
    #allocation8 [shape = 'u8[4096]{0}', space=vmem, size = 0x1000, scoped, tag = 'input window, operand 2, single buffered']
    #allocation9 [shape = 'u8[4096]{0}', space=vmem, size = 0x1000, scoped, tag = 'output window, operand 0, single buffered']
    %9 = vsyncpa [#allocation4], 0
    %10 = vsyncpa [#allocation7], 0
    %11 = vsyncpa [#allocation5], 0
    // Predicated region
    $region2: #{tpu_custom_call.1} parent=1 // pred_check
      _
    $region3: #{tpu_custom_call.1} parent=1 // pred_check_branch
      %13 = sbr.rel (0) target = $region5
    $region4: #{tpu_custom_call.1} parent=1 // pred_region
      %s14 = sadd.s32 0, 0
      %p15 = scmp.lt.s32.totalorder %s14, 0
      %s16 = scalar_select %p15, %s14, 0
      %s18 = ssub.s32 128, 128
      %19 = vsyncadd [#allocation4], %s18
      %s20 = smul.addr %s16, 128
      %s21 = scalar_lea.hbm %s0, %s20
      %s23 = sshll.u32 [#allocation3], 4
      %s24 = int_to_ptr.vmem [resolvable:$true] %s23
      %26 = dma.hbm_to_vmem [thread:$0]  %s21, 128, %s24, [#allocation4]
    $region5: #{tpu_custom_call.1} parent=1 // pred_fallthru
      _
    // Predicated region
    $region6: #{tpu_custom_call.1} parent=1 // pred_check
      _
    $region7: #{tpu_custom_call.1} parent=1 // pred_check_branch
      %28 = sbr.rel (0) target = $region9
    $region8: #{tpu_custom_call.1} parent=1 // pred_region
      %s29 = sadd.s32 0, 0
      %p30 = scmp.lt.s32.totalorder %s29, 0
      %s31 = scalar_select %p30, %s29, 0
      %s33 = ssub.s32 128, 128
      %34 = vsyncadd [#allocation7], %s33
      %s35 = smul.addr %s31, 128
      %s36 = scalar_lea.hbm %s1, %s35
      %s38 = sshll.u32 [#allocation6], 4
      %s39 = int_to_ptr.vmem [resolvable:$true] %s38
      %41 = dma.hbm_to_vmem [thread:$0]  %s36, 128, %s39, [#allocation7]
    $region9: #{tpu_custom_call.1} parent=1 // pred_fallthru
      _
    // Predicated region
    $region10: #{tpu_custom_call.1} parent=1 // pred_check
      _
    $region11: #{tpu_custom_call.1} parent=1 // pred_check_branch
      %43 = sbr.rel (0) target = $region13
    $region12: #{tpu_custom_call.1} parent=1 // pred_region
      %s44 = sadd.s32 0, 0
      %p45 = scmp.lt.s32.totalorder %s44, 0
      %s46 = scalar_select %p45, %s44, 0
      %s48 = ssub.s32 128, 128
      %49 = vsyncadd [#allocation7], %s48
      %s50 = smul.addr %s46, 128
      %s51 = scalar_lea.hbm %s2, %s50
      %s53 = sshll.u32 [#allocation8], 4
      %s54 = int_to_ptr.vmem [resolvable:$true] %s53
      %56 = dma.hbm_to_vmem [thread:$0]  %s51, 128, %s54, [#allocation7]
    $region13: #{tpu_custom_call.1} parent=1 // pred_fallthru
      _
    // Predicated region
    $region14: #{tpu_custom_call.1} parent=1 // pred_check
      _
    $region15: #{tpu_custom_call.1} parent=1 // pred_check_branch
      %58 = sbr.rel (0) target = $region17
    $region16: #{tpu_custom_call.1} parent=1 // pred_region
      %s59 = sadd.s32 0, 0
      %p60 = scmp.lt.s32.totalorder %s59, 0
      %s61 = scalar_select %p60, %s59, 0
      %p62 = scmp.lt.s32.totalorder %s61, 0
      %s63 = scalar_select %p62, %s61, 0
      %s64 = smul.addr %s63, 8
      %s65 = scalar_lea.vmem %s3, %s64
      %s66 = sadd.s32 0, 0
      %p67 = scmp.lt.s32.totalorder %s66, 0
      %s68 = scalar_select %p67, %s66, 0
    $region17: #{tpu_custom_call.1} parent=1 // pred_fallthru
      _
    // Predicated region
    $region18: #{tpu_custom_call.1} parent=1 // pred_check
      _
    $region19: #{tpu_custom_call.1} parent=1 // pred_check_branch
      %70 = sbr.rel (0) target = $region21
    $region20: #{tpu_custom_call.1} parent=1 // pred_region
      %71 = dma.done [#allocation4], 128
    $region21: #{tpu_custom_call.1} parent=1 // pred_fallthru
      _
    // Predicated region
    $region22: #{tpu_custom_call.1} parent=1 // pred_check
      _
    $region23: #{tpu_custom_call.1} parent=1 // pred_check_branch
      %73 = sbr.rel (0) target = $region25
    $region24: #{tpu_custom_call.1} parent=1 // pred_region
      %74 = dma.done [#allocation7], 128
    $region25: #{tpu_custom_call.1} parent=1 // pred_fallthru
      _
    // Predicated region
    $region26: #{tpu_custom_call.1} parent=1 // pred_check
      _
    $region27: #{tpu_custom_call.1} parent=1 // pred_check_branch
      %76 = sbr.rel (0) target = $region29
    $region28: #{tpu_custom_call.1} parent=1 // pred_region
      %77 = dma.done [#allocation7], 128
    $region29: #{tpu_custom_call.1} parent=1 // pred_fallthru
      _
    %s78 = sadd.s32 0, 0
    %p79 = scmp.lt.s32.totalorder %s78, 0
    %s80 = scalar_select %p79, %s78, 0
    %p81 = scmp.lt.s32.totalorder %s80, 0
    %s82 = scalar_select %p81, %s80, 0
    %s83 = smul.addr %s82, 8
    %s84 = scalar_lea.vmem %s3, %s83
    %s85 = sadd.s32 0, 0
    %p86 = scmp.lt.s32.totalorder %s85, 0
    %s87 = scalar_select %p86, %s85, 0
    %s88 = sadd.s32 0, 0
    %p89 = scmp.lt.s32.totalorder %s88, 0
    %s90 = scalar_select %p89, %s88, 0
    %s91 = sadd.s32 0, 0
    %p92 = scmp.lt.s32.totalorder %s91, 0
    %s93 = scalar_select %p92, %s91, 0
    %s94 = sadd.s32 0, 0
    %p95 = scmp.lt.s32.totalorder %s94, 0
    %s96 = scalar_select %p95, %s94, 0
    %p97 = scmp.lt.s32.totalorder %s96, 0
    %s98 = scalar_select %p97, %s96, 0
    %s99 = smul.addr %s98, 8
    %s100 = scalar_lea.vmem %s3, %s99
    %s101 = sadd.s32 0, 0
    %p102 = scmp.lt.s32.totalorder %s101, 0
    %s103 = scalar_select %p102, %s101, 0
    %p104 = scmp.eq.s32.totalorder 0, 0
    // Predicated region
    $region30: #{tpu_custom_call.1} parent=1 // pred_check
      %p105 = pneg %p104
    $region31: #{tpu_custom_call.1} parent=1 // pred_check_branch
      %107 = sbr.rel (%p105) target = $region33
    $region32: #{tpu_custom_call.1} parent=1 // pred_region
      %vm108 = vcmask 261120
      %109 = vst.msk [vmem:[#allocation2] sm:$0xff] %vm108, 0.0
    $region33: #{tpu_custom_call.1} parent=1 // pred_fallthru
      _
    %v110 = vld [vmem:[#allocation3] sm:$0xff]
    %v111 = vld [vmem:[#allocation6] sm:$0xff]
    %v112 = vld [vmem:[#allocation8] sm:$0xff]
    %v113 = vld [vmem:[%s100] sm:$0xff]
    %v114 = vlaneseq
    %v115 = vand.u32 %v114, 127
    %v116 = vand.u32 %v115, 3
    %vm117 = vcmp.eq.s32.totalorder %v116, 2
    %v118 = vmul.f32 %v110, 1.1512926
    %v119 = vadd.f32 %v118, 0.6907755
    %v120 = vmul.f32 %v119, 1.442695
    %v121 = vpow.pop %v120
    %v122 = vsel %vm117, %v121, %v110
    %v123 = vmul.f32 %v111, 1.1512926
    %v124 = vadd.f32 %v123, 0.6907755
    %v125 = vmul.f32 %v124, 1.442695
    %v126 = vpow.pop %v125
    %v127 = vsel %vm117, %v126, %v111
    %v128 = vmul.f32 %v112, 2.3025851
    %v129 = vmul.f32 %v128, %v127
    %v130 = vand.u32 2147483647, %v129
    %v131 = vsel %vm117, %v130, %v112
    %v132 = vrcp.pop %v131
    %v133 = vmul.f32 %v131, %v132
    %v134 = vsub.f32 2.0, %v133
    %v135 = vmul.f32 %v132, %v134
    %v136 = vsub.f32 %v122, %v127
    %v137 = vmul.f32 %v136, %v136
    %v138 = vmul.f32 %v137, %v135
    %v139 = vlaneseq
    %v140 = vshrl.u32 %v139, 7
    %v141 = vadd.s32 %v140, 8
    %v142 = vadd.s32 %v140, 16
    %v143 = vadd.s32 %v140, 24
    %v144 = vadd.s32 %v140, 32
    %v145 = vadd.s32 %v140, 40
    %v146 = vadd.s32 %v140, 48
    %v147 = vadd.s32 %v140, 56
    %v148 = vadd.s32 %v140, 64
    %v149 = vadd.s32 %v140, 72
    %v150 = vadd.s32 %v140, 80
    %v151 = vadd.s32 %v140, 88
    %v152 = vadd.s32 %v140, 96
    %v153 = vadd.s32 %v140, 104
    %v154 = vadd.s32 %v140, 112
    %v155 = vadd.s32 %v140, 120
    %v156 = vshra.s32 %v140, 2
    %v157 = vshra.s32 %v141, 2
    %v158 = vshra.s32 %v142, 2
    %v159 = vshra.s32 %v143, 2
    %v160 = vshra.s32 %v144, 2
    %v161 = vshra.s32 %v145, 2
    %v162 = vshra.s32 %v146, 2
    %v163 = vshra.s32 %v147, 2
    %v164 = vshra.s32 %v148, 2
    %v165 = vshra.s32 %v149, 2
    %v166 = vshra.s32 %v150, 2
    %v167 = vshra.s32 %v151, 2
    %v168 = vshra.s32 %v152, 2
    %v169 = vshra.s32 %v153, 2
    %v170 = vshra.s32 %v154, 2
    %v171 = vshra.s32 %v155, 2
    %vm172 = vcmp.eq.s32.totalorder %v156, %v115
    %vm173 = vcmp.eq.s32.totalorder %v157, %v115
    %vm174 = vcmp.eq.s32.totalorder %v158, %v115
    %vm175 = vcmp.eq.s32.totalorder %v159, %v115
    %vm176 = vcmp.eq.s32.totalorder %v160, %v115
    %vm177 = vcmp.eq.s32.totalorder %v161, %v115
    %vm178 = vcmp.eq.s32.totalorder %v162, %v115
    %vm179 = vcmp.eq.s32.totalorder %v163, %v115
    %vm180 = vcmp.eq.s32.totalorder %v164, %v115
    %vm181 = vcmp.eq.s32.totalorder %v165, %v115
    %vm182 = vcmp.eq.s32.totalorder %v166, %v115
    %vm183 = vcmp.eq.s32.totalorder %v167, %v115
    %vm184 = vcmp.eq.s32.totalorder %v168, %v115
    %vm185 = vcmp.eq.s32.totalorder %v169, %v115
    %vm186 = vcmp.eq.s32.totalorder %v170, %v115
    %vm187 = vcmp.eq.s32.totalorder %v171, %v115
    %v188 = vsel %vm172, 1, 0
    %v189 = vsel %vm173, 1, 0
    %v190 = vsel %vm174, 1, 0
    %v191 = vsel %vm175, 1, 0
    %v192 = vsel %vm176, 1, 0
    %v193 = vsel %vm177, 1, 0
    %v194 = vsel %vm178, 1, 0
    %v195 = vsel %vm179, 1, 0
    %v196 = vsel %vm180, 1, 0
    %v197 = vsel %vm181, 1, 0
    %v198 = vsel %vm182, 1, 0
    %v199 = vsel %vm183, 1, 0
    %v200 = vsel %vm184, 1, 0
    %v201 = vsel %vm185, 1, 0
    %v202 = vsel %vm186, 1, 0
    %v203 = vsel %vm187, 1, 0
    %v204 = vcvt.s32.f32 %v188
    %v205 = vcvt.s32.f32 %v189
    %v206 = vcvt.s32.f32 %v190
    %v207 = vcvt.s32.f32 %v191
    %v208 = vcvt.s32.f32 %v192
    %v209 = vcvt.s32.f32 %v193
    %v210 = vcvt.s32.f32 %v194
    %v211 = vcvt.s32.f32 %v195
    %v212 = vcvt.s32.f32 %v196
    %v213 = vcvt.s32.f32 %v197
    %v214 = vcvt.s32.f32 %v198
    %v215 = vcvt.s32.f32 %v199
    %v216 = vcvt.s32.f32 %v200
    %v217 = vcvt.s32.f32 %v201
    %v218 = vcvt.s32.f32 %v202
    %v219 = vcvt.s32.f32 %v203
    %v220 = vpack.c.bf16 %v138, %v138
    %v221 = vunpack.c.l.bf16 %v220
    %v222 = vsub.f32 %v138, %v221
    %223 = vmatprep.subr.mxu0 0.0
    %224 = vmatpush1.msra.mxu0 %v204
    %225 = vmatprep.subr.mxu0 0.0
    %226 = vmatpush1.msra.mxu0 %v205
    %227 = vmatprep.subr.mxu0 0.0
    %228 = vmatpush1.msra.mxu0 %v206
    %229 = vmatprep.subr.mxu0 0.0
    %230 = vmatpush1.msra.mxu0 %v207
    %231 = vmatprep.subr.mxu0 0.0
    %232 = vmatpush1.msra.mxu0 %v208
    %233 = vmatprep.subr.mxu0 0.0
    %234 = vmatpush1.msra.mxu0 %v209
    %235 = vmatprep.subr.mxu0 0.0
    %236 = vmatpush1.msra.mxu0 %v210
    %237 = vmatprep.subr.mxu0 0.0
    %238 = vmatpush1.msra.mxu0 %v211
    %239 = vmatprep.subr.mxu0 0.0
    %240 = vmatpush1.msra.mxu0 %v212
    %241 = vmatprep.subr.mxu0 0.0
    %242 = vmatpush1.msra.mxu0 %v213
    %243 = vmatprep.subr.mxu0 0.0
    %244 = vmatpush1.msra.mxu0 %v214
    %245 = vmatprep.subr.mxu0 0.0
    %246 = vmatpush1.msra.mxu0 %v215
    %247 = vmatprep.subr.mxu0 0.0
    %248 = vmatpush1.msra.mxu0 %v216
    %249 = vmatprep.subr.mxu0 0.0
    %250 = vmatpush1.msra.mxu0 %v217
    %251 = vmatprep.subr.mxu0 0.0
    %252 = vmatpush1.msra.mxu0 %v218
    %253 = vmatprep.subr.mxu0 0.0
    %254 = vmatpush1.msra.mxu0 %v219
    %255 = vmatprep.subr.mxu0 0.0
    %256 = vmatpush1.msra.mxu0 0.0
    %257 = vmatprep.subr.mxu0 0.0
    %258 = vmatpush1.msra.mxu0 0.0
    %259 = vmatprep.subr.mxu0 0.0
    %260 = vmatpush1.msra.mxu0 0.0
    %261 = vmatprep.subr.mxu0 0.0
    %262 = vmatpush1.msra.mxu0 0.0
    %263 = vmatprep.subr.mxu0 0.0
    %264 = vmatpush1.msra.mxu0 0.0
    %265 = vmatprep.subr.mxu0 0.0
    %266 = vmatpush1.msra.mxu0 0.0
    %267 = vmatprep.subr.mxu0 0.0
    %268 = vmatpush1.msra.mxu0 0.0
    %269 = vmatprep.subr.mxu0 0.0
    %270 = vmatpush1.msra.mxu0 0.0
    %271 = vmatprep.subr.mxu0 0.0
    %272 = vmatpush1.msra.mxu0 0.0
    %273 = vmatprep.subr.mxu0 0.0
    %274 = vmatpush1.msra.mxu0 0.0
    %275 = vmatprep.subr.mxu0 0.0
    %276 = vmatpush1.msra.mxu0 0.0
    %277 = vmatprep.subr.mxu0 0.0
    %278 = vmatpush1.msra.mxu0 0.0
    %279 = vmatprep.subr.mxu0 0.0
    %280 = vmatpush1.msra.mxu0 0.0
    %281 = vmatprep.subr.mxu0 0.0
    %282 = vmatpush1.msra.mxu0 0.0
    %283 = vmatprep.subr.mxu0 0.0
    %284 = vmatpush1.msra.mxu0 0.0
    %285 = vmatprep.subr.mxu0 0.0
    %286 = vmatpush1.msra.mxu0 0.0
    %287 = vmatprep.mubr.f32.mxu0 0.0
    %288 = vmatmul.mubr.f32.gmra.mrb[0].mxu0 %v222
    %v289 = vpop.f32.mrb[0].mxu0
    %v290 = vadd.f32 0.0, %v289
    %v291 = vpop.f32.mrb[0].mxu0
    %292 = vdwg.mxu0
    %293 = vmatprep.subr.mxu0 0.0
    %294 = vmatpush1.msra.mxu0 %v204
    %295 = vmatprep.subr.mxu0 0.0
    %296 = vmatpush1.msra.mxu0 %v205
    %297 = vmatprep.subr.mxu0 0.0
    %298 = vmatpush1.msra.mxu0 %v206
    %299 = vmatprep.subr.mxu0 0.0
    %300 = vmatpush1.msra.mxu0 %v207
    %301 = vmatprep.subr.mxu0 0.0
    %302 = vmatpush1.msra.mxu0 %v208
    %303 = vmatprep.subr.mxu0 0.0
    %304 = vmatpush1.msra.mxu0 %v209
    %305 = vmatprep.subr.mxu0 0.0
    %306 = vmatpush1.msra.mxu0 %v210
    %307 = vmatprep.subr.mxu0 0.0
    %308 = vmatpush1.msra.mxu0 %v211
    %309 = vmatprep.subr.mxu0 0.0
    %310 = vmatpush1.msra.mxu0 %v212
    %311 = vmatprep.subr.mxu0 0.0
    %312 = vmatpush1.msra.mxu0 %v213
    %313 = vmatprep.subr.mxu0 0.0
    %314 = vmatpush1.msra.mxu0 %v214
    %315 = vmatprep.subr.mxu0 0.0
    %316 = vmatpush1.msra.mxu0 %v215
    %317 = vmatprep.subr.mxu0 0.0
    %318 = vmatpush1.msra.mxu0 %v216
    %319 = vmatprep.subr.mxu0 0.0
    %320 = vmatpush1.msra.mxu0 %v217
    %321 = vmatprep.subr.mxu0 0.0
    %322 = vmatpush1.msra.mxu0 %v218
    %323 = vmatprep.subr.mxu0 0.0
    %324 = vmatpush1.msra.mxu0 %v219
    %325 = vmatprep.subr.mxu0 0.0
    %326 = vmatpush1.msra.mxu0 0.0
    %327 = vmatprep.subr.mxu0 0.0
    %328 = vmatpush1.msra.mxu0 0.0
    %329 = vmatprep.subr.mxu0 0.0
    %330 = vmatpush1.msra.mxu0 0.0
    %331 = vmatprep.subr.mxu0 0.0
    %332 = vmatpush1.msra.mxu0 0.0
    %333 = vmatprep.subr.mxu0 0.0
    %334 = vmatpush1.msra.mxu0 0.0
    %335 = vmatprep.subr.mxu0 0.0
    %336 = vmatpush1.msra.mxu0 0.0
    %337 = vmatprep.subr.mxu0 0.0
    %338 = vmatpush1.msra.mxu0 0.0
    %339 = vmatprep.subr.mxu0 0.0
    %340 = vmatpush1.msra.mxu0 0.0
    %341 = vmatprep.subr.mxu0 0.0
    %342 = vmatpush1.msra.mxu0 0.0
    %343 = vmatprep.subr.mxu0 0.0
    %344 = vmatpush1.msra.mxu0 0.0
    %345 = vmatprep.subr.mxu0 0.0
    %346 = vmatpush1.msra.mxu0 0.0
    %347 = vmatprep.subr.mxu0 0.0
    %348 = vmatpush1.msra.mxu0 0.0
    %349 = vmatprep.subr.mxu0 0.0
    %350 = vmatpush1.msra.mxu0 0.0
    %351 = vmatprep.subr.mxu0 0.0
    %352 = vmatpush1.msra.mxu0 0.0
    %353 = vmatprep.subr.mxu0 0.0
    %354 = vmatpush1.msra.mxu0 0.0
    %355 = vmatprep.subr.mxu0 0.0
    %356 = vmatpush1.msra.mxu0 0.0
    %357 = vmatprep.mubr.f32.mxu0 0.0
    %358 = vmatmul.mubr.f32.gmra.mrb[0].mxu0 %v221
    %v359 = vpop.f32.mrb[0].mxu0
    %v360 = vadd.f32 %v290, %v359
    %v361 = vpop.f32.mrb[0].mxu0
    %362 = vdwg.mxu0
    %s363 = sadd.s32 0, 0
    %s364 = smul.u32 %s363, 8
    %s365 = ssub.s32 8, %s364
    %v366 = vsub.f32 0.0, %v113
    %v367 = vmul.f32 %v366, 1.442695
    %v368 = vpow.pop %v367
    %v369 = vld [vmem:[#allocation2] sm:$0xff]
    %v370 = vstv %s365
    %vm371 = vcmp.lt.s32.totalorder %v140, %v370
    %v372 = vmul.f32 %v368, %v360
    %v373 = vsel %vm371, %v372, 0.0
    %v374 = vadd.f32 %v369, %v373
    %vm375 = vcmask 261120
    %376 = vst.msk [vmem:[#allocation2] sm:$0xff] %vm375, %v374
    // Predicated region
    $region34: #{tpu_custom_call.1} parent=1 // pred_check
      %p377 = pneg %p104
    $region35: #{tpu_custom_call.1} parent=1 // pred_check_branch
      %379 = sbr.rel (%p377) target = $region37
    $region36: #{tpu_custom_call.1} parent=1 // pred_region
      %v380 = vld [vmem:[#allocation2] sm:$0xff]
      %v381 = vsel %vm375, %v380, 0.0
      %382 = vadd.xlane.f32.xlu0 %v381
      %v383 = vpop.xlane.xlu0 %382
      %v384 = vrot.slane %v383, 4
      %v385 = vadd.f32 %v383, %v384
      %v386 = vrot.slane %v385, 2
      %v387 = vadd.f32 %v385, %v386
      %v388 = vrot.slane %v387, 1
      %v389 = vadd.f32 %v387, %v388
      %s390 = vtos %v389
      %v391 = vstv %s390
      %392 = vst [vmem:[#allocation9] sm:$0xff] %v391
    $region37: #{tpu_custom_call.1} parent=1 // pred_fallthru
      _
    // Predicated region
    $region38: #{tpu_custom_call.1} parent=1 // pred_check
      _
    $region39: #{tpu_custom_call.1} parent=1 // pred_check_branch
      %394 = sbr.rel (0) target = $region41
    $region40: #{tpu_custom_call.1} parent=1 // pred_region
      %s396 = ssub.s32 128, 128
      %397 = vsyncadd [#allocation5], %s396
      %s399 = sshll.u32 [#allocation9], 4
      %s400 = int_to_ptr.vmem [resolvable:$true] %s399
      %402 = dma.vmem_to_hbm [thread:$0]  %s400, 128, %s4, [#allocation5]
    $region41: #{tpu_custom_call.1} parent=1 // pred_fallthru
      _
    // Predicated region
    $region42: #{tpu_custom_call.1} parent=1 // pred_check
      _
    $region43: #{tpu_custom_call.1} parent=1 // pred_check_branch
      %404 = sbr.rel (0) target = $region45
    $region44: #{tpu_custom_call.1} parent=1 // pred_region
      %405 = dma.done [#allocation5], 128
    $region45: #{tpu_custom_call.1} parent=1 // pred_fallthru
      _
    %406 = vsyncpa [#allocation4], 1
    %407 = vsyncpa [#allocation7], 1
    %408 = vsyncpa [#allocation5], 1

</llo_original>
